<compile_context>
chip_gen: v7x
topology: tpu7x:2x2x1
jax: 0.10.0
libtpu: 0.0.40
codegen_flags: <defaults>
</compile_context>

<pallas_src>
import functools

import jax
import jax.numpy as jnp
from jax import lax
from jax.experimental import pallas as pl
from jax.experimental.pallas import tpu as pltpu

LANES = 128                # vreg lane width
SUBLANES = 8               # vreg sublane height
TILE = SUBLANES * LANES    # 1024 elements = one (8,128) f32 vreg
MAX_BLOCK_ROWS = 4096      # 4096*128*4B = 2 MiB per f32 input block
CHUNK_ROWS = 512           # strip-mine sub-chunk (512*128*4B = 256 KiB f32)


def _bce_blur_kernel(pred_ref, true_ref, out_ref, *, inv_alpha, block_rows,
                     chunk_rows, tail_valid_rows, mask_tail):
    """One grid step: blurred BCE-with-logits on a (block_rows, 128) block,
    strip-mined over (chunk_rows, 128) sub-chunks and folded to an (8, 128)
    partial sum written to this block's output slot."""
    num_chunks = block_rows // chunk_rows

    def chunk_partial(c, valid_rows=None):
        start = c * chunk_rows
        if not isinstance(start, int):
            start = pl.multiple_of(start, chunk_rows)
        x = pred_ref[pl.ds(start, chunk_rows), :].astype(jnp.float32)
        y = true_ref[pl.ds(start, chunk_rows), :].astype(jnp.float32)

        # Numerically-stable BCEWithLogitsLoss (reduction='none'):
        #   loss = max(x, 0) - x*y + log1p(exp(-|x|))
        # Reuse e = exp(-|x|) for the sigmoid (one fewer EUP exp).
        e = jnp.exp(-jnp.abs(x))
        loss = jnp.maximum(x, 0.0) - x * y + jnp.log1p(e)
        # Approx reciprocal runs on the EUP slot (slack here); ~1e-3 rel error.
        inv_1pe = pl.reciprocal(1.0 + e, approx=True)
        p = jnp.where(x >= 0, inv_1pe, e * inv_1pe)          # sigmoid(x)
        alpha_factor = 1.0 - jnp.exp((p - y - 1.0) * inv_alpha)
        val = loss * alpha_factor

        if valid_rows is not None:
            # Row-granular tail mask: one small row iota, no column iota.
            # (jnp.where is a true select; garbage exp() of stale VMEM in the
            #  invalid rows is discarded, not propagated.)
            row = lax.broadcasted_iota(jnp.int32, (chunk_rows, 1), 0)
            val = jnp.where(row < valid_rows, val, 0.0)

        # (chunk_rows,128) -> (chunk_rows//8, 8, 128) -> VALU-fold to one (8,128) vreg.
        return val.reshape(chunk_rows // SUBLANES, SUBLANES, LANES).sum(axis=0)

    def accumulate(masked):
        def body(c, acc):
            if masked:
                valid = jnp.clip(tail_valid_rows - c * chunk_rows, 0, chunk_rows)
                return acc + chunk_partial(c, valid)
            return acc + chunk_partial(c)

        zero = jnp.zeros((SUBLANES, LANES), jnp.float32)
        if num_chunks == 1:
            out_ref[0] = body(0, zero)
        else:
            out_ref[0] = lax.fori_loop(0, num_chunks, body, zero, unroll=True)

    if mask_tail:
        i = pl.program_id(0)
        last = pl.num_programs(0) - 1

        @pl.when(i != last)
        def _():
            accumulate(masked=False)

        @pl.when(i == last)
        def _():
            accumulate(masked=True)
    else:
        accumulate(masked=False)


def _loss_terms(x, y, inv_alpha):
    """Elementwise blurred BCE-with-logits (pure jnp; used only for the <1024-elem
    ragged tail when n is not 1024-aligned)."""
    x = x.astype(jnp.float32)
    y = y.astype(jnp.float32)
    loss = jnp.maximum(x, 0.0) - x * y + jnp.log1p(jnp.exp(-jnp.abs(x)))
    p = jax.nn.sigmoid(x)
    return loss * (1.0 - jnp.exp((p - y - 1.0) * inv_alpha))


def bce_blur_with_logits_loss(pred, true, alpha=0.05):
    """Mean( BCEWithLogits(pred, true) * (1 - exp((sigmoid(pred)-true-1)/(alpha+1e-4))) )."""
    assert pred.shape == true.shape
    n = pred.size
    inv_alpha = 1.0 / (alpha + 0.0001)

    # Contiguous flatten: no copy. Keep native dtype (bf16 ok); cast in-kernel.
    pred_f = pred.reshape(-1)
    true_f = true.reshape(-1)

    # Kernel handles the largest 1024-aligned prefix (rows multiple of 8).
    kernel_rows = (n // TILE) * SUBLANES
    n_kernel = kernel_rows * LANES
    rem = n - n_kernel                    # 0..1023 ragged tail elements

    total = jnp.float32(0.0)
    if rem:
        # Tiny ragged tail folded with plain jnp (negligible).
        # TODO(synk): fold the ragged tail in-kernel to avoid the prefix-slice copy
        # (one extra HBM pass) when n is not 1024-aligned.
        total = total + jnp.sum(
            _loss_terms(pred_f[n_kernel:], true_f[n_kernel:], inv_alpha))

    if kernel_rows:
        # When rem == 0 the slice is the identity and the reshape is a bitcast: zero copy.
        pred2 = pred_f[:n_kernel].reshape(kernel_rows, LANES)
        true2 = true_f[:n_kernel].reshape(kernel_rows, LANES)

        if kernel_rows <= MAX_BLOCK_ROWS:
            block_rows = kernel_rows          # full dim: single block, never masked
        else:
            block_rows = MAX_BLOCK_ROWS       # 2 MiB f32 per input block
        grid = pl.cdiv(kernel_rows, block_rows)
        tail_valid_rows = kernel_rows - (grid - 1) * block_rows
        mask_tail = tail_valid_rows != block_rows   # only a partial last block needs it

        if block_rows > CHUNK_ROWS and block_rows % CHUNK_ROWS == 0:
            chunk_rows = CHUNK_ROWS
        else:
            chunk_rows = block_rows           # small block: single shot

        kernel = functools.partial(
            _bce_blur_kernel, inv_alpha=inv_alpha, block_rows=block_rows,
            chunk_rows=chunk_rows, tail_valid_rows=tail_valid_rows,
            mask_tail=mask_tail)

        itemsize = jnp.dtype(pred.dtype).itemsize
        cost = pl.CostEstimate(
            flops=16 * n_kernel,
            transcendentals=4 * n_kernel,
            bytes_accessed=2 * n_kernel * itemsize + grid * SUBLANES * LANES * 4)

        partials = pl.pallas_call(
            kernel,
            out_shape=jax.ShapeDtypeStruct((grid, SUBLANES, LANES), jnp.float32),
            grid_spec=pltpu.PrefetchScalarGridSpec(
                num_scalar_prefetch=0,
                grid=(grid,),
                in_specs=[
                    pl.BlockSpec((block_rows, LANES), lambda i: (i, 0)),
                    pl.BlockSpec((block_rows, LANES), lambda i: (i, 0)),
                ],
                out_specs=pl.BlockSpec((1, SUBLANES, LANES), lambda i: (i, 0, 0)),
            ),
            compiler_params=pltpu.CompilerParams(
                # Independent per-block outputs -> megacore-friendly on v7x.
                dimension_semantics=("parallel",),
                # ~10 MiB actual use (8 MiB pipeline buffers + chunk temporaries);
                # 32 MiB leaves headroom and stays well under v7x's 64 MiB VMEM.
                vmem_limit_bytes=32 * 1024 * 1024,
            ),
            cost_estimate=cost,
        )(pred2, true2)
        total = total + jnp.sum(partials)   # tiny (grid,8,128) tree-reduction

    return total / jnp.float32(n)


def _reference(pred, true, alpha=0.05):
    x = pred.astype(jnp.float32)
    y = true.astype(jnp.float32)
    loss = jnp.maximum(x, 0.0) - x * y + jnp.log1p(jnp.exp(-jnp.abs(x)))
    p = jax.nn.sigmoid(x)
    alpha_factor = 1.0 - jnp.exp((p - y - 1.0) / (alpha + 0.0001))
    return jnp.mean(loss * alpha_factor)


if __name__ == "__main__":
    key = jax.random.PRNGKey(0)
    k1, k2 = jax.random.split(key)
    # NCHW inputs, as a PyTorch detection head would produce.
    pred = jax.random.normal(k1, (2, 4, 16, 16), dtype=jnp.float32)
    true = (jax.random.uniform(k2, (2, 4, 16, 16)) > 0.5).astype(jnp.float32)

    out = bce_blur_with_logits_loss(pred, true, alpha=0.05)
    out = jax.block_until_ready(out)

    ref = _reference(pred, true, alpha=0.05)
    # Tolerance accounts for the in-kernel sigmoid using the EUP approximate
    # reciprocal (pl.reciprocal(approx=True), ~1e-3 relative error).
    assert jnp.allclose(out, ref, atol=1e-3, rtol=5e-3), (out, ref)

    print("KERNEL_OK")
</pallas_src>

<mosaic_0001>
module attributes {stable_mosaic.version = 11 : i64} {
  func.func @_bce_blur_kernel(%arg0: i32, %arg1: memref<16x128xf32, #tpu.memory_space<vmem>>, %arg2: memref<16x128xf32, #tpu.memory_space<vmem>>, %arg3: memref<1x8x128xf32, #tpu.memory_space<vmem>>) attributes {dimension_semantics = [#tpu.dimension_semantics<parallel>], iteration_bounds = array<i64: 1>, scalar_prefetch = 0 : i64, scratch_operands = 0 : i64, tpu.core_type = #tpu.core_type<tc>, window_params = [{transform_indices = @transform_0, window_bounds = array<i64: 16, 128>}, {transform_indices = @transform_1, window_bounds = array<i64: 16, 128>}, {transform_indices = @transform_2, window_bounds = array<i64: 1, 8, 128>}]} {
    %cst = arith.constant 0.000000e+00 : f32
    %0 = vector.broadcast %cst : f32 to vector<8x128xf32>
    %c0 = arith.constant 0 : index
    %c0_0 = arith.constant 0 : index
    %1 = vector.load %arg1[%c0, %c0_0] : memref<16x128xf32, #tpu.memory_space<vmem>>, vector<16x128xf32>
    %c0_1 = arith.constant 0 : index
    %c0_2 = arith.constant 0 : index
    %2 = vector.load %arg2[%c0_1, %c0_2] : memref<16x128xf32, #tpu.memory_space<vmem>>, vector<16x128xf32>
    %3 = math.absf %1 : vector<16x128xf32>
    %cst_3 = arith.constant 0.000000e+00 : f32
    %4 = vector.broadcast %cst_3 : f32 to vector<16x128xf32>
    %5 = arith.subf %4, %3 : vector<16x128xf32>
    %6 = math.exp %5 : vector<16x128xf32>
    %cst_4 = arith.constant 0.000000e+00 : f32
    %7 = vector.broadcast %cst_4 : f32 to vector<16x128xf32>
    %8 = arith.maximumf %1, %7 : vector<16x128xf32>
    %9 = arith.mulf %1, %2 : vector<16x128xf32>
    %10 = arith.subf %8, %9 : vector<16x128xf32>
    %11 = math.log1p %6 : vector<16x128xf32>
    %12 = arith.addf %10, %11 : vector<16x128xf32>
    %cst_5 = arith.constant 1.000000e+00 : f32
    %13 = vector.broadcast %cst_5 : f32 to vector<16x128xf32>
    %14 = arith.addf %13, %6 : vector<16x128xf32>
    %15 = tpu.reciprocal %14 {approx = true} : vector<16x128xf32> -> vector<16x128xf32>
    %cst_6 = arith.constant 0.000000e+00 : f32
    %16 = vector.broadcast %cst_6 : f32 to vector<16x128xf32>
    %17 = arith.cmpf oge, %1, %16 : vector<16x128xf32>
    %18 = arith.mulf %6, %15 : vector<16x128xf32>
    %19 = arith.select %17, %15, %18 : vector<16x128xi1>, vector<16x128xf32>
    %20 = arith.subf %19, %2 : vector<16x128xf32>
    %cst_7 = arith.constant 1.000000e+00 : f32
    %21 = vector.broadcast %cst_7 : f32 to vector<16x128xf32>
    %22 = arith.subf %20, %21 : vector<16x128xf32>
    %cst_8 = arith.constant 19.9600792 : f32
    %23 = vector.broadcast %cst_8 : f32 to vector<16x128xf32>
    %24 = arith.mulf %22, %23 : vector<16x128xf32>
    %25 = math.exp %24 : vector<16x128xf32>
    %cst_9 = arith.constant 1.000000e+00 : f32
    %26 = vector.broadcast %cst_9 : f32 to vector<16x128xf32>
    %27 = arith.subf %26, %25 : vector<16x128xf32>
    %28 = arith.mulf %12, %27 : vector<16x128xf32>
    %29 = vector.shape_cast %28 : vector<16x128xf32> to vector<2x8x128xf32>
    %cst_10 = arith.constant dense<0.000000e+00> : vector<8x128xf32>
    %30 = vector.multi_reduction <add>, %29, %cst_10 [0] : vector<2x8x128xf32> to vector<8x128xf32>
    %31 = arith.addf %0, %30 : vector<8x128xf32>
    %c0_11 = arith.constant 0 : index
    %c0_12 = arith.constant 0 : index
    %c0_13 = arith.constant 0 : index
    %32 = vector.load %arg3[%c0_11, %c0_12, %c0_13] : memref<1x8x128xf32, #tpu.memory_space<vmem>>, vector<1x8x128xf32>
    %33 = vector.shape_cast %32 : vector<1x8x128xf32> to vector<8x128xf32>
    %34 = vector.shape_cast %31 : vector<8x128xf32> to vector<1x8x128xf32>
    tpu.vector_store %arg3[%c0_11, %c0_12, %c0_13], %34 {strides = array<i32>} : memref<1x8x128xf32, #tpu.memory_space<vmem>>, vector<1x8x128xf32>,
    return
  }
  func.func @transform_0(%arg0: i32) -> (i32, i32) {
    %c0_i32 = arith.constant 0 : i32
    %c0_i32_0 = arith.constant 0 : i32
    return %arg0, %c0_i32 : i32, i32
  }
  func.func @transform_1(%arg0: i32) -> (i32, i32) {
    %c0_i32 = arith.constant 0 : i32
    %c0_i32_0 = arith.constant 0 : i32
    return %arg0, %c0_i32 : i32, i32
  }
  func.func @transform_2(%arg0: i32) -> (i32, i32, i32) {
    %c0_i32 = arith.constant 0 : i32
    %c0_i32_0 = arith.constant 0 : i32
    %c0_i32_1 = arith.constant 0 : i32
    return %arg0, %c0_i32, %c0_i32_0 : i32, i32, i32
  }
}

</mosaic_0001>

<llo_original>
// kernel: tpu_custom_call.1
$region0: #{tpu_custom_call.1}
  #allocation0 [shape = 'u32[]', space=smem, size = 0x4, offset = 0x4, fixed_abs, tag = 'smem constant byte address 0x4 - core index']
  #allocation1 [shape = 'u32[144,128]{1,0:T(1,128)}', space=vmem, size = 0x12000, scoped, tag = 'internal scratch']
  %s0 = inlined_call_operand.hbm [shape: f32[16,128], index: 0, kind: input, shape index: {}]
  %s1 = inlined_call_operand.hbm [shape: f32[16,128], index: 1, kind: input, shape index: {}]
  %s2 = inlined_call_operand.hbm [shape: f32[1,8,128], index: 2, kind: output, shape index: {}]
  %s3 = sld [smem:[#allocation0]]
  $region26: #{tpu_custom_call.1} parent=0
    _
  %s5 = ssub.s32 1, %s3
  %s6 = scalar_select 0, %s5, %s3
  $region1: #{tpu_custom_call.1} parent=0
    #allocation2 [shape = 'u8[8192]{0}', space=vmem, size = 0x2000, scoped, tag = 'input window, operand 0, single buffered']
    #allocation3 [shape = 's32[1]{0}', space=sflag, size = 0x4, scoped, tag = 'scoped memory for tpu_custom_call.1']
    #allocation4 [shape = 's32[1]{0}', space=sflag, size = 0x4, scoped, tag = 'scoped memory for tpu_custom_call.1']
    #allocation5 [shape = 'u8[8192]{0}', space=vmem, size = 0x2000, scoped, tag = 'input window, operand 1, single buffered']
    #allocation6 [shape = 's32[1]{0}', space=sflag, size = 0x4, scoped, tag = 'scoped memory for tpu_custom_call.1']
    #allocation7 [shape = 'u8[4096]{0}', space=vmem, size = 0x1000, scoped, tag = 'output window, operand 0, single buffered']
    %7 = vsyncpa [#allocation3], 0
    %8 = vsyncpa [#allocation6], 0
    %9 = vsyncpa [#allocation4], 0
    // Predicated region
    $region2: #{tpu_custom_call.1} parent=1 // pred_check
      _
    $region3: #{tpu_custom_call.1} parent=1 // pred_check_branch
      %11 = sbr.rel (0) target = $region5
    $region4: #{tpu_custom_call.1} parent=1 // pred_region
      %s13 = ssub.s32 256, 256
      %14 = vsyncadd [#allocation3], %s13
      %s15 = sshll.u32 [#allocation2], 4
      %s16 = int_to_ptr.vmem [resolvable:$true] %s15
      %21 = dma.hbm_to_vmem [thread:$0]  %s0, 256, %s16, [#allocation3], 128, 128, 8
    $region5: #{tpu_custom_call.1} parent=1 // pred_fallthru
      _
    // Predicated region
    $region6: #{tpu_custom_call.1} parent=1 // pred_check
      _
    $region7: #{tpu_custom_call.1} parent=1 // pred_check_branch
      %23 = sbr.rel (0) target = $region9
    $region8: #{tpu_custom_call.1} parent=1 // pred_region
      %s25 = ssub.s32 256, 256
      %26 = vsyncadd [#allocation6], %s25
      %s27 = sshll.u32 [#allocation5], 4
      %s28 = int_to_ptr.vmem [resolvable:$true] %s27
      %33 = dma.hbm_to_vmem [thread:$0]  %s1, 256, %s28, [#allocation6], 128, 128, 8
    $region9: #{tpu_custom_call.1} parent=1 // pred_fallthru
      _
    // Predicated region
    $region10: #{tpu_custom_call.1} parent=1 // pred_check
      _
    $region11: #{tpu_custom_call.1} parent=1 // pred_check_branch
      %35 = sbr.rel (0) target = $region13
    $region12: #{tpu_custom_call.1} parent=1 // pred_region
      %36 = dma.done [#allocation3], 256
    $region13: #{tpu_custom_call.1} parent=1 // pred_fallthru
      _
    // Predicated region
    $region14: #{tpu_custom_call.1} parent=1 // pred_check
      _
    $region15: #{tpu_custom_call.1} parent=1 // pred_check_branch
      %38 = sbr.rel (0) target = $region17
    $region16: #{tpu_custom_call.1} parent=1 // pred_region
      %39 = dma.done [#allocation6], 256
    $region17: #{tpu_custom_call.1} parent=1 // pred_fallthru
      _
    %v40 = vld [vmem:[#allocation2] sm:$0xff]
    %v41 = vld [vmem:[#allocation2 + $0x8] sm:$0xff]
    %v42 = vld [vmem:[#allocation5] sm:$0xff]
    %v43 = vld [vmem:[#allocation5 + $0x8] sm:$0xff]
    %v44 = vand.u32 2147483647, %v40
    %v45 = vand.u32 2147483647, %v41
    %v46 = vsub.f32 0.0, %v44
    %v47 = vsub.f32 0.0, %v45
    %v48 = vmul.f32 %v46, 1.442695
    %v49 = vpow.pop %v48
    %v50 = vmul.f32 %v47, 1.442695
    %v51 = vpow.pop %v50
    %v52 = vmax.f32 %v40, 0.0
    %v53 = vmax.f32 %v41, 0.0
    %v54 = vmul.f32 %v40, %v42
    %v55 = vmul.f32 %v41, %v43
    %v56 = vsub.f32 %v52, %v54
    %v57 = vsub.f32 %v53, %v55
    %v58 = vadd.f32 %v49, 1.0
    %v59 = vlog2.pop %v58
    %v60 = vmul.f32 %v59, 0.6931472
    %v61 = vmul.f32 -0.5, %v49
    %v62 = vadd.f32 %v61, 1.0
    %v63 = vmul.f32 %v62, %v49
    %v64 = vand.u32 2147483647, %v49
    %vm65 = vcmp.lt.f32.partialorder %v64, 0.0004427343
    %v66 = vsel %vm65, %v63, %v60
    %v67 = vadd.f32 %v51, 1.0
    %v68 = vlog2.pop %v67
    %v69 = vmul.f32 %v68, 0.6931472
    %v70 = vmul.f32 -0.5, %v51
    %v71 = vadd.f32 %v70, 1.0
    %v72 = vmul.f32 %v71, %v51
    %v73 = vand.u32 2147483647, %v51
    %vm74 = vcmp.lt.f32.partialorder %v73, 0.0004427343
    %v75 = vsel %vm74, %v72, %v69
    %v76 = vadd.f32 %v56, %v66
    %v77 = vadd.f32 %v57, %v75
    %v78 = vadd.f32 %v49, 1.0
    %v79 = vadd.f32 %v51, 1.0
    %v80 = vrcp.pop %v78
    %v81 = vrcp.pop %v79
    %vm82 = vcmp.ge.f32.partialorder %v40, 0.0
    %vm83 = vcmp.ge.f32.partialorder %v41, 0.0
    %v84 = vmul.f32 %v49, %v80
    %v85 = vmul.f32 %v51, %v81
    %v86 = vsel %vm82, %v80, %v84
    %v87 = vsel %vm83, %v81, %v85
    %v88 = vsub.f32 %v86, %v42
    %v89 = vsub.f32 %v87, %v43
    %v90 = vsub.f32 %v88, 1.0
    %v91 = vsub.f32 %v89, 1.0
    %v92 = vmul.f32 %v90, 19.96008
    %v93 = vmul.f32 %v91, 19.96008
    %v94 = vmul.f32 %v92, 1.442695
    %v95 = vpow.pop %v94
    %v96 = vmul.f32 %v93, 1.442695
    %v97 = vpow.pop %v96
    %v98 = vsub.f32 1.0, %v95
    %v99 = vsub.f32 1.0, %v97
    %v100 = vmul.f32 %v76, %v98
    %v101 = vmul.f32 %v77, %v99
    %v102 = vadd.f32 %v100, %v101
    %v103 = vadd.f32 %v102, 0.0
    %104 = vst [vmem:[#allocation7] sm:$0xff] %v103
    // Predicated region
    $region18: #{tpu_custom_call.1} parent=1 // pred_check
      _
    $region19: #{tpu_custom_call.1} parent=1 // pred_check_branch
      %106 = sbr.rel (0) target = $region21
    $region20: #{tpu_custom_call.1} parent=1 // pred_region
      %s108 = ssub.s32 128, 128
      %109 = vsyncadd [#allocation4], %s108
      %s111 = sshll.u32 [#allocation7], 4
      %s112 = int_to_ptr.vmem [resolvable:$true] %s111
      %114 = dma.vmem_to_hbm [thread:$0]  %s112, 128, %s2, [#allocation4]
    $region21: #{tpu_custom_call.1} parent=1 // pred_fallthru
      _
    // Predicated region
    $region22: #{tpu_custom_call.1} parent=1 // pred_check
      _
    $region23: #{tpu_custom_call.1} parent=1 // pred_check_branch
      %116 = sbr.rel (0) target = $region25
    $region24: #{tpu_custom_call.1} parent=1 // pred_region
      %117 = dma.done [#allocation4], 128
    $region25: #{tpu_custom_call.1} parent=1 // pred_fallthru
      _
    %118 = vsyncpa [#allocation3], 1
    %119 = vsyncpa [#allocation6], 1
    %120 = vsyncpa [#allocation4], 1

</llo_original>
